<compile_context>
chip_gen: v5e
topology: v5e:2x2
jax: 0.10.0
libtpu: 0.0.40
codegen_flags: <defaults>
</compile_context>

<pallas_src>
import functools

import jax
import jax.numpy as jnp
from jax.experimental import pallas as pl
from jax.experimental.pallas import tpu as pltpu


def _relu_kernel(x_ref, o_ref):
    # Elementwise ReLU on the whole VMEM-resident block (pure VPU work).
    o_ref[...] = jnp.maximum(x_ref[...], 0.0)


def _lane_dense_2d(total: int) -> tuple:
    """Free (no-padding, no-copy) 2D view with dense sublanes and a wide lane dim."""
    for rows in (8, 4, 2, 1):
        if total % rows == 0:
            return (rows, total // rows)
    return (1, total)  # unreachable (rows=1 always divides), kept for clarity


@functools.partial(jax.jit, donate_argnums=0)
def relu_pallas(x: jax.Array) -> jax.Array:
    """In-place ReLU (input buffer is donated) via a single whole-array Pallas kernel."""
    orig_shape = x.shape
    slab_shape = _lane_dense_2d(x.size)
    x2d = x.reshape(slab_shape)  # contiguous reshape: no data movement
    itemsize = jnp.dtype(x.dtype).itemsize

    out2d = pl.pallas_call(
        _relu_kernel,
        out_shape=jax.ShapeDtypeStruct(x2d.shape, x2d.dtype),
        in_specs=[pl.BlockSpec(memory_space=pltpu.MemorySpace.VMEM)],
        out_specs=pl.BlockSpec(memory_space=pltpu.MemorySpace.VMEM),
        input_output_aliases={0: 0},  # in-place; donation makes this a real alias
        cost_estimate=pl.CostEstimate(
            flops=x.size,                       # one max per element
            bytes_accessed=2 * x.size * itemsize,  # read + write
            transcendentals=0,
        ),
    )(x2d)

    return out2d.reshape(orig_shape)


if __name__ == "__main__":
    key = jax.random.PRNGKey(0)
    # Shape implied by the module's forward: (1, 912, 7, 7), NCHW.
    x176 = jax.random.normal(key, (1, 912, 7, 7), dtype=jnp.float32)

    # Reference computed BEFORE the call: relu_pallas donates/consumes its input
    # (ReLU(inplace=True) semantics), so x176 must not be read afterwards.
    ref = jnp.maximum(x176, 0.0)
    jax.block_until_ready(ref)

    y = relu_pallas(x176)
    jax.block_until_ready(y)

    assert y.shape == (1, 912, 7, 7) and y.dtype == jnp.float32
    assert jnp.allclose(y, ref), "ReLU mismatch"

    print("KERNEL_OK")
</pallas_src>

<mosaic_0001>
module attributes {stable_mosaic.version = 11 : i64} {
  func.func @_relu_kernel(%arg0: memref<8x5586xf32, #tpu.memory_space<vmem>>, %arg1: memref<8x5586xf32, #tpu.memory_space<vmem>>) attributes {dimension_semantics = [], scalar_prefetch = 0 : i64, scratch_operands = 0 : i64, tpu.core_type = #tpu.core_type<tc>} {
    %c0 = arith.constant 0 : index
    %c0_0 = arith.constant 0 : index
    %0 = vector.load %arg0[%c0, %c0_0] : memref<8x5586xf32, #tpu.memory_space<vmem>>, vector<8x5586xf32>
    %cst = arith.constant 0.000000e+00 : f32
    %1 = vector.broadcast %cst : f32 to vector<8x5586xf32>
    %2 = arith.maximumf %0, %1 : vector<8x5586xf32>
    %c0_1 = arith.constant 0 : index
    %c0_2 = arith.constant 0 : index
    %3 = vector.load %arg1[%c0_1, %c0_2] : memref<8x5586xf32, #tpu.memory_space<vmem>>, vector<8x5586xf32>
    tpu.vector_store %arg1[%c0_1, %c0_2], %2 {strides = array<i32>} : memref<8x5586xf32, #tpu.memory_space<vmem>>, vector<8x5586xf32>,
    return
  }
}

</mosaic_0001>

<llo_original>
// kernel: relu_pallas.1
$region0: #{relu_pallas.1}
  #allocation0 [shape = 'u32[]', space=smem, size = 0x4, offset = 0x4, fixed_abs, tag = 'smem constant byte address 0x4 - core index']
  #allocation1 [shape = 'u32[72,128]{1,0:T(1,128)}', space=vmem, size = 0x9000, scoped, tag = 'internal scratch']
  %s0 = inlined_call_operand.vmem [shape: f32[8,5586], index: 0, kind: input, shape index: {}, may-alias: {0,1}]
  %s1 = inlined_call_operand.vmem [shape: f32[8,5586], index: 1, kind: output, shape index: {}, may-alias: {0,1}]
  %s2 = sld [smem:[#allocation0]]
  $region14: #{relu_pallas.1} parent=0
    _
  %s4 = ssub.s32 1, %s2
  %s5 = scalar_select 0, %s4, %s2
  // Predicated region
  $region2: #{relu_pallas.1} parent=0 // pred_check
    _
  $region3: #{relu_pallas.1} parent=0 // pred_check_branch
    %7 = sbr.rel (0) target = $region5
  $region4: #{relu_pallas.1} parent=0 // pred_region
    _
  $region5: #{relu_pallas.1} parent=0 // pred_fallthru
    _
  %v8 = vld [vmem:[%s0] sm:$0xff]
  %v9 = vld [vmem:[%s0 + $0x8] sm:$0xff]
  %v10 = vld [vmem:[%s0 + $0x10] sm:$0xff]
  %v11 = vld [vmem:[%s0 + $0x18] sm:$0xff]
  %v12 = vld [vmem:[%s0 + $0x20] sm:$0xff]
  %v13 = vld [vmem:[%s0 + $0x28] sm:$0xff]
  %v14 = vld [vmem:[%s0 + $0x30] sm:$0xff]
  %v15 = vld [vmem:[%s0 + $0x38] sm:$0xff]
  %v16 = vld [vmem:[%s0 + $0x40] sm:$0xff]
  %v17 = vld [vmem:[%s0 + $0x48] sm:$0xff]
  %v18 = vld [vmem:[%s0 + $0x50] sm:$0xff]
  %v19 = vld [vmem:[%s0 + $0x58] sm:$0xff]
  %v20 = vld [vmem:[%s0 + $0x60] sm:$0xff]
  %v21 = vld [vmem:[%s0 + $0x68] sm:$0xff]
  %v22 = vld [vmem:[%s0 + $0x70] sm:$0xff]
  %v23 = vld [vmem:[%s0 + $0x78] sm:$0xff]
  %v24 = vld [vmem:[%s0 + $0x80] sm:$0xff]
  %v25 = vld [vmem:[%s0 + $0x88] sm:$0xff]
  %v26 = vld [vmem:[%s0 + $0x90] sm:$0xff]
  %v27 = vld [vmem:[%s0 + $0x98] sm:$0xff]
  %v28 = vld [vmem:[%s0 + $0xa0] sm:$0xff]
  %v29 = vld [vmem:[%s0 + $0xa8] sm:$0xff]
  %v30 = vld [vmem:[%s0 + $0xb0] sm:$0xff]
  %v31 = vld [vmem:[%s0 + $0xb8] sm:$0xff]
  %v32 = vld [vmem:[%s0 + $0xc0] sm:$0xff]
  %v33 = vld [vmem:[%s0 + $0xc8] sm:$0xff]
  %v34 = vld [vmem:[%s0 + $0xd0] sm:$0xff]
  %v35 = vld [vmem:[%s0 + $0xd8] sm:$0xff]
  %v36 = vld [vmem:[%s0 + $0xe0] sm:$0xff]
  %v37 = vld [vmem:[%s0 + $0xe8] sm:$0xff]
  %v38 = vld [vmem:[%s0 + $0xf0] sm:$0xff]
  %v39 = vld [vmem:[%s0 + $0xf8] sm:$0xff]
  %v40 = vld [vmem:[%s0 + $0x100] sm:$0xff]
  %v41 = vld [vmem:[%s0 + $0x108] sm:$0xff]
  %v42 = vld [vmem:[%s0 + $0x110] sm:$0xff]
  %v43 = vld [vmem:[%s0 + $0x118] sm:$0xff]
  %v44 = vld [vmem:[%s0 + $0x120] sm:$0xff]
  %v45 = vld [vmem:[%s0 + $0x128] sm:$0xff]
  %v46 = vld [vmem:[%s0 + $0x130] sm:$0xff]
  %v47 = vld [vmem:[%s0 + $0x138] sm:$0xff]
  %v48 = vld [vmem:[%s0 + $0x140] sm:$0xff]
  %v49 = vld [vmem:[%s0 + $0x148] sm:$0xff]
  %v50 = vld [vmem:[%s0 + $0x150] sm:$0xff]
  %v51 = vld [vmem:[%s0 + $0x158] sm:$0xff]
  %v52 = vmax.f32 %v8, 0.0
  %v53 = vmax.f32 %v9, 0.0
  %v54 = vmax.f32 %v10, 0.0
  %v55 = vmax.f32 %v11, 0.0
  %v56 = vmax.f32 %v12, 0.0
  %v57 = vmax.f32 %v13, 0.0
  %v58 = vmax.f32 %v14, 0.0
  %v59 = vmax.f32 %v15, 0.0
  %v60 = vmax.f32 %v16, 0.0
  %v61 = vmax.f32 %v17, 0.0
  %v62 = vmax.f32 %v18, 0.0
  %v63 = vmax.f32 %v19, 0.0
  %v64 = vmax.f32 %v20, 0.0
  %v65 = vmax.f32 %v21, 0.0
  %v66 = vmax.f32 %v22, 0.0
  %v67 = vmax.f32 %v23, 0.0
  %v68 = vmax.f32 %v24, 0.0
  %v69 = vmax.f32 %v25, 0.0
  %v70 = vmax.f32 %v26, 0.0
  %v71 = vmax.f32 %v27, 0.0
  %v72 = vmax.f32 %v28, 0.0
  %v73 = vmax.f32 %v29, 0.0
  %v74 = vmax.f32 %v30, 0.0
  %v75 = vmax.f32 %v31, 0.0
  %v76 = vmax.f32 %v32, 0.0
  %v77 = vmax.f32 %v33, 0.0
  %v78 = vmax.f32 %v34, 0.0
  %v79 = vmax.f32 %v35, 0.0
  %v80 = vmax.f32 %v36, 0.0
  %v81 = vmax.f32 %v37, 0.0
  %v82 = vmax.f32 %v38, 0.0
  %v83 = vmax.f32 %v39, 0.0
  %v84 = vmax.f32 %v40, 0.0
  %v85 = vmax.f32 %v41, 0.0
  %v86 = vmax.f32 %v42, 0.0
  %v87 = vmax.f32 %v43, 0.0
  %v88 = vmax.f32 %v44, 0.0
  %v89 = vmax.f32 %v45, 0.0
  %v90 = vmax.f32 %v46, 0.0
  %v91 = vmax.f32 %v47, 0.0
  %v92 = vmax.f32 %v48, 0.0
  %v93 = vmax.f32 %v49, 0.0
  %v94 = vmax.f32 %v50, 0.0
  %v95 = vmax.f32 %v51, 0.0
  %96 = vst [vmem:[%s1] sm:$0xff] %v52
  %97 = vst [vmem:[%s1 + $0x8] sm:$0xff] %v53
  %98 = vst [vmem:[%s1 + $0x10] sm:$0xff] %v54
  %99 = vst [vmem:[%s1 + $0x18] sm:$0xff] %v55
  %100 = vst [vmem:[%s1 + $0x20] sm:$0xff] %v56
  %101 = vst [vmem:[%s1 + $0x28] sm:$0xff] %v57
  %102 = vst [vmem:[%s1 + $0x30] sm:$0xff] %v58
  %103 = vst [vmem:[%s1 + $0x38] sm:$0xff] %v59
  %104 = vst [vmem:[%s1 + $0x40] sm:$0xff] %v60
  %105 = vst [vmem:[%s1 + $0x48] sm:$0xff] %v61
  %106 = vst [vmem:[%s1 + $0x50] sm:$0xff] %v62
  %107 = vst [vmem:[%s1 + $0x58] sm:$0xff] %v63
  %108 = vst [vmem:[%s1 + $0x60] sm:$0xff] %v64
  %109 = vst [vmem:[%s1 + $0x68] sm:$0xff] %v65
  %110 = vst [vmem:[%s1 + $0x70] sm:$0xff] %v66
  %111 = vst [vmem:[%s1 + $0x78] sm:$0xff] %v67
  %112 = vst [vmem:[%s1 + $0x80] sm:$0xff] %v68
  %113 = vst [vmem:[%s1 + $0x88] sm:$0xff] %v69
  %114 = vst [vmem:[%s1 + $0x90] sm:$0xff] %v70
  %115 = vst [vmem:[%s1 + $0x98] sm:$0xff] %v71
  %116 = vst [vmem:[%s1 + $0xa0] sm:$0xff] %v72
  %117 = vst [vmem:[%s1 + $0xa8] sm:$0xff] %v73
  %118 = vst [vmem:[%s1 + $0xb0] sm:$0xff] %v74
  %119 = vst [vmem:[%s1 + $0xb8] sm:$0xff] %v75
  %120 = vst [vmem:[%s1 + $0xc0] sm:$0xff] %v76
  %121 = vst [vmem:[%s1 + $0xc8] sm:$0xff] %v77
  %122 = vst [vmem:[%s1 + $0xd0] sm:$0xff] %v78
  %123 = vst [vmem:[%s1 + $0xd8] sm:$0xff] %v79
  %124 = vst [vmem:[%s1 + $0xe0] sm:$0xff] %v80
  %125 = vst [vmem:[%s1 + $0xe8] sm:$0xff] %v81
  %126 = vst [vmem:[%s1 + $0xf0] sm:$0xff] %v82
  %127 = vst [vmem:[%s1 + $0xf8] sm:$0xff] %v83
  %128 = vst [vmem:[%s1 + $0x100] sm:$0xff] %v84
  %129 = vst [vmem:[%s1 + $0x108] sm:$0xff] %v85
  %130 = vst [vmem:[%s1 + $0x110] sm:$0xff] %v86
  %131 = vst [vmem:[%s1 + $0x118] sm:$0xff] %v87
  %132 = vst [vmem:[%s1 + $0x120] sm:$0xff] %v88
  %133 = vst [vmem:[%s1 + $0x128] sm:$0xff] %v89
  %134 = vst [vmem:[%s1 + $0x130] sm:$0xff] %v90
  %135 = vst [vmem:[%s1 + $0x138] sm:$0xff] %v91
  %136 = vst [vmem:[%s1 + $0x140] sm:$0xff] %v92
  %137 = vst [vmem:[%s1 + $0x148] sm:$0xff] %v93
  %138 = vst [vmem:[%s1 + $0x150] sm:$0xff] %v94
  %vm139 = vcmask 670720
  %140 = vst.msk [vmem:[%s1 + $0x158] sm:$0xff] %vm139, %v95
  // Predicated region
  $region6: #{relu_pallas.1} parent=0 // pred_check
    _
  $region7: #{relu_pallas.1} parent=0 // pred_check_branch
    %142 = sbr.rel (0) target = $region9
  $region8: #{relu_pallas.1} parent=0 // pred_region
    _
  $region9: #{relu_pallas.1} parent=0 // pred_fallthru
    _
  // Predicated region
  $region10: #{relu_pallas.1} parent=0 // pred_check
    _
  $region11: #{relu_pallas.1} parent=0 // pred_check_branch
    %144 = sbr.rel (0) target = $region13
  $region12: #{relu_pallas.1} parent=0 // pred_region
    _
  $region13: #{relu_pallas.1} parent=0 // pred_fallthru
    _

</llo_original>
